<compile_context>
chip_gen: v6e
topology: v6e:2x2x1
jax: 0.10.0
libtpu: 0.0.40
codegen_flags: <defaults>
</compile_context>

<pallas_src>
import functools
import math

import jax
import jax.numpy as jnp
from jax.experimental import pallas as pl
from jax.experimental.pallas import tpu as pltpu


def _ddn_mixer_kernel(q_ref, out_ref, *, n_agents, n_quantiles, group):
    # q_ref:   (tile_rows, group * n_agents * n_quantiles)   lane-dense input
    # out_ref: (tile_rows, group * n_quantiles)               lane-dense output
    x = q_ref[...]
    aq = n_agents * n_quantiles
    parts = []
    for j in range(group):
        base = j * aq
        # Agent a's quantiles for row-group j occupy lanes
        # [base + a*Q, base + (a+1)*Q).  Reduce over agents with A-1 static
        # lane-slice adds; accumulate in f32 (matters for bf16 inputs).
        acc = x[:, base:base + n_quantiles].astype(jnp.float32)
        for a in range(1, n_agents):
            lo = base + a * n_quantiles
            acc = acc + x[:, lo:lo + n_quantiles].astype(jnp.float32)
        parts.append(acc)
    out = parts[0] if group == 1 else jnp.concatenate(parts, axis=-1)
    out_ref[...] = out.astype(out_ref.dtype)


def _choose_tile_rows(rows_total, lane_width, dtype_bytes, *,
                      target_block_bytes=4 << 20, max_rows=4096):
    """Rows per grid step: ~target_block_bytes of input per step, multiple of 8,
    capped so double-buffered in+out blocks stay inside every chip's scoped
    VMEM (v5e default 16 MiB, v7x physical 64 MiB)."""
    rows = target_block_bytes // max(1, lane_width * dtype_bytes)
    rows = int(min(max(rows, 8), max_rows))
    rows = max(8, (rows // 8) * 8)
    if rows_total <= rows:
        # Whole axis fits in one step.  If it is big enough, split in two so
        # the "parallel" grid axis can be sharded across v7x's 2 TensorCores.
        if rows_total >= 64:
            return ((rows_total + 15) // 16) * 8
        return rows_total  # block == full dim -> legal even if not %8
    return rows


def ddn_mixer_forward(agent_qs, batch=None, target=False, *, tile_rows=None):
    """agent_qs: (B, T, n_agents, n_quantiles) -> (B, T, 1, n_quantiles).

    `batch` / `target` are accepted for API parity with the PyTorch module and
    do not affect the computation.
    """
    B, T, A, Q = agent_qs.shape
    BT = B * T

    # Smallest g such that (g * Q) % 128 == 0  ->  lane-dense output rows.
    g = 128 // math.gcd(Q, 128)
    if g > 1 and BT % g != 0:
        g = 1  # fallback: correctness over the lane-dense store path

    rows_total = BT // g
    lane_in = g * A * Q
    lane_out = g * Q

    # Zero-copy row-major flatten: (B, T, A, Q) -> (BT/g, g*A*Q).
    x = agent_qs.reshape(rows_total, lane_in)

    dtype_bytes = jnp.dtype(agent_qs.dtype).itemsize
    if tile_rows is None:
        tile_rows = _choose_tile_rows(rows_total, lane_in, dtype_bytes)

    grid = (pl.cdiv(rows_total, tile_rows),)
    kernel = functools.partial(
        _ddn_mixer_kernel, n_agents=A, n_quantiles=Q, group=g)

    out = pl.pallas_call(
        kernel,
        out_shape=jax.ShapeDtypeStruct((rows_total, lane_out), agent_qs.dtype),
        grid=grid,
        in_specs=[pl.BlockSpec((tile_rows, lane_in), lambda i: (i, 0))],
        out_specs=pl.BlockSpec((tile_rows, lane_out), lambda i: (i, 0)),
        compiler_params=pltpu.CompilerParams(
            dimension_semantics=("parallel",),
            vmem_limit_bytes=32 * 1024 * 1024,
        ),
    )(x)

    # Zero-copy reshape back to the module's output shape.
    return out.reshape(B, T, 1, Q)


if __name__ == "__main__":
    # Small shapes consistent with the module's forward contract.
    batch_size = 2
    episode_length = 8
    n_agents = 4
    n_quantiles = 32   # args.ddn_n_quantiles == args.ddn_n_target_quantiles

    key = jax.random.PRNGKey(0)
    agent_qs = jax.random.normal(
        key, (batch_size, episode_length, n_agents, n_quantiles), dtype=jnp.float32
    )

    q_mixture = ddn_mixer_forward(agent_qs, batch=None, target=False)
    q_mixture = jax.block_until_ready(q_mixture)

    # Reference check against plain JAX (mirrors torch .sum(dim=2, keepdim=True)).
    ref = jnp.sum(agent_qs, axis=2, keepdims=True)
    assert q_mixture.shape == (batch_size, episode_length, 1, n_quantiles)
    assert jnp.allclose(q_mixture, ref, atol=1e-6, rtol=1e-6)

    print("KERNEL_OK")
</pallas_src>

<mosaic_0001>
module attributes {stable_mosaic.version = 11 : i64} {
  func.func @_ddn_mixer_kernel(%arg0: i32, %arg1: memref<4x512xf32, #tpu.memory_space<vmem>>, %arg2: memref<4x128xf32, #tpu.memory_space<vmem>>) attributes {dimension_semantics = [#tpu.dimension_semantics<parallel>], iteration_bounds = array<i64: 1>, scalar_prefetch = 0 : i64, scratch_operands = 0 : i64, tpu.core_type = #tpu.core_type<tc>, window_params = [{transform_indices = @transform_0, window_bounds = array<i64: 4, 512>}, {transform_indices = @transform_1, window_bounds = array<i64: 4, 128>}]} {
    %c0 = arith.constant 0 : index
    %c0_0 = arith.constant 0 : index
    %0 = vector.load %arg1[%c0, %c0_0] : memref<4x512xf32, #tpu.memory_space<vmem>>, vector<4x512xf32>
    %1 = vector.extract_strided_slice %0 {offsets = [0, 0], sizes = [4, 32], strides = [1, 1]} : vector<4x512xf32> to vector<4x32xf32>
    %2 = vector.extract_strided_slice %0 {offsets = [0, 32], sizes = [4, 32], strides = [1, 1]} : vector<4x512xf32> to vector<4x32xf32>
    %3 = arith.addf %1, %2 : vector<4x32xf32>
    %4 = vector.extract_strided_slice %0 {offsets = [0, 64], sizes = [4, 32], strides = [1, 1]} : vector<4x512xf32> to vector<4x32xf32>
    %5 = arith.addf %3, %4 : vector<4x32xf32>
    %6 = vector.extract_strided_slice %0 {offsets = [0, 96], sizes = [4, 32], strides = [1, 1]} : vector<4x512xf32> to vector<4x32xf32>
    %7 = arith.addf %5, %6 : vector<4x32xf32>
    %8 = vector.extract_strided_slice %0 {offsets = [0, 128], sizes = [4, 32], strides = [1, 1]} : vector<4x512xf32> to vector<4x32xf32>
    %9 = vector.extract_strided_slice %0 {offsets = [0, 160], sizes = [4, 32], strides = [1, 1]} : vector<4x512xf32> to vector<4x32xf32>
    %10 = arith.addf %8, %9 : vector<4x32xf32>
    %11 = vector.extract_strided_slice %0 {offsets = [0, 192], sizes = [4, 32], strides = [1, 1]} : vector<4x512xf32> to vector<4x32xf32>
    %12 = arith.addf %10, %11 : vector<4x32xf32>
    %13 = vector.extract_strided_slice %0 {offsets = [0, 224], sizes = [4, 32], strides = [1, 1]} : vector<4x512xf32> to vector<4x32xf32>
    %14 = arith.addf %12, %13 : vector<4x32xf32>
    %15 = vector.extract_strided_slice %0 {offsets = [0, 256], sizes = [4, 32], strides = [1, 1]} : vector<4x512xf32> to vector<4x32xf32>
    %16 = vector.extract_strided_slice %0 {offsets = [0, 288], sizes = [4, 32], strides = [1, 1]} : vector<4x512xf32> to vector<4x32xf32>
    %17 = arith.addf %15, %16 : vector<4x32xf32>
    %18 = vector.extract_strided_slice %0 {offsets = [0, 320], sizes = [4, 32], strides = [1, 1]} : vector<4x512xf32> to vector<4x32xf32>
    %19 = arith.addf %17, %18 : vector<4x32xf32>
    %20 = vector.extract_strided_slice %0 {offsets = [0, 352], sizes = [4, 32], strides = [1, 1]} : vector<4x512xf32> to vector<4x32xf32>
    %21 = arith.addf %19, %20 : vector<4x32xf32>
    %22 = vector.extract_strided_slice %0 {offsets = [0, 384], sizes = [4, 32], strides = [1, 1]} : vector<4x512xf32> to vector<4x32xf32>
    %23 = vector.extract_strided_slice %0 {offsets = [0, 416], sizes = [4, 32], strides = [1, 1]} : vector<4x512xf32> to vector<4x32xf32>
    %24 = arith.addf %22, %23 : vector<4x32xf32>
    %25 = vector.extract_strided_slice %0 {offsets = [0, 448], sizes = [4, 32], strides = [1, 1]} : vector<4x512xf32> to vector<4x32xf32>
    %26 = arith.addf %24, %25 : vector<4x32xf32>
    %27 = vector.extract_strided_slice %0 {offsets = [0, 480], sizes = [4, 32], strides = [1, 1]} : vector<4x512xf32> to vector<4x32xf32>
    %28 = arith.addf %26, %27 : vector<4x32xf32>
    %29 = tpu.concatenate %7, %14, %21, %28 in 1 : vector<4x32xf32>, vector<4x32xf32>, vector<4x32xf32>, vector<4x32xf32> -> vector<4x128xf32>
    %c0_1 = arith.constant 0 : index
    %c0_2 = arith.constant 0 : index
    %30 = vector.load %arg2[%c0_1, %c0_2] : memref<4x128xf32, #tpu.memory_space<vmem>>, vector<4x128xf32>
    tpu.vector_store %arg2[%c0_1, %c0_2], %29 {strides = array<i32>} : memref<4x128xf32, #tpu.memory_space<vmem>>, vector<4x128xf32>,
    return
  }
  func.func @transform_0(%arg0: i32) -> (i32, i32) {
    %c0_i32 = arith.constant 0 : i32
    %c0_i32_0 = arith.constant 0 : i32
    return %arg0, %c0_i32 : i32, i32
  }
  func.func @transform_1(%arg0: i32) -> (i32, i32) {
    %c0_i32 = arith.constant 0 : i32
    %c0_i32_0 = arith.constant 0 : i32
    return %arg0, %c0_i32 : i32, i32
  }
}

</mosaic_0001>

<llo_original>
// kernel: tpu_custom_call.1
$region0: #{tpu_custom_call.1}
  #allocation0 [shape = 'u32[]', space=smem, size = 0x4, offset = 0x4, fixed_abs, tag = 'smem constant byte address 0x4 - core index']
  #allocation1 [shape = 'u32[144,128]{1,0:T(1,128)}', space=vmem, size = 0x12000, scoped, tag = 'internal scratch']
  %s0 = inlined_call_operand.hbm [shape: f32[4,512], index: 0, kind: input, shape index: {}]
  %s1 = inlined_call_operand.hbm [shape: f32[4,128], index: 1, kind: output, shape index: {}]
  %s2 = sld [smem:[#allocation0]]
  $region18: #{tpu_custom_call.1} parent=0
    _
  %s4 = ssub.s32 1, %s2
  %s5 = scalar_select 0, %s4, %s2
  $region1: #{tpu_custom_call.1} parent=0
    #allocation2 [shape = 'u8[8192]{0}', space=vmem, size = 0x2000, scoped, tag = 'input window, operand 0, single buffered']
    #allocation3 [shape = 's32[1]{0}', space=sflag, size = 0x4, scoped, tag = 'scoped memory for tpu_custom_call.1']
    #allocation4 [shape = 's32[1]{0}', space=sflag, size = 0x4, scoped, tag = 'scoped memory for tpu_custom_call.1']
    #allocation5 [shape = 'u8[2048]{0}', space=vmem, size = 0x800, scoped, tag = 'output window, operand 0, single buffered']
    %6 = vsyncpa [#allocation3], 0
    %7 = vsyncpa [#allocation4], 0
    // Predicated region
    $region2: #{tpu_custom_call.1} parent=1 // pred_check
      _
    $region3: #{tpu_custom_call.1} parent=1 // pred_check_branch
      %9 = sbr.rel (0) target = $region5
    $region4: #{tpu_custom_call.1} parent=1 // pred_region
      %s11 = ssub.s32 256, 256
      %12 = vsyncadd [#allocation3], %s11
      %s14 = sshll.u32 [#allocation2], 4
      %s15 = int_to_ptr.vmem [resolvable:$true] %s14
      %17 = dma.hbm_to_vmem [thread:$0]  %s0, 256, %s15, [#allocation3]
    $region5: #{tpu_custom_call.1} parent=1 // pred_fallthru
      _
    // Predicated region
    $region6: #{tpu_custom_call.1} parent=1 // pred_check
      _
    $region7: #{tpu_custom_call.1} parent=1 // pred_check_branch
      %19 = sbr.rel (0) target = $region9
    $region8: #{tpu_custom_call.1} parent=1 // pred_region
      %20 = dma.done [#allocation3], 256
    $region9: #{tpu_custom_call.1} parent=1 // pred_fallthru
      _
    %v21 = vld [vmem:[#allocation2] sm:$0xff]
    %v22 = vld [vmem:[#allocation2 + $0x8] sm:$0xff]
    %24 = vrot.lane.b32.xlu0 %v21, 96
    %v25 = vpop.permute.xlu0 %24
    %v27 = vadd.f32 %v21, %v25
    %28 = vrot.lane.b32.xlu0 %v21, 64
    %v29 = vpop.permute.xlu0 %28
    %v31 = vadd.f32 %v27, %v29
    %32 = vrot.lane.b32.xlu0 %v21, 32
    %v33 = vpop.permute.xlu0 %32
    %v35 = vadd.f32 %v31, %v33
    %v36 = vrot.slane %v21, 4
    %v38 = vrot.slane %v25, 4
    %v40 = vadd.f32 %v36, %v38
    %v41 = vrot.slane %v29, 4
    %v43 = vadd.f32 %v40, %v41
    %v44 = vrot.slane %v33, 4
    %v46 = vadd.f32 %v43, %v44
    %48 = vrot.lane.b32.xlu0 %v22, 96
    %v49 = vpop.permute.xlu0 %48
    %v51 = vadd.f32 %v22, %v49
    %52 = vrot.lane.b32.xlu0 %v22, 64
    %v53 = vpop.permute.xlu0 %52
    %v55 = vadd.f32 %v51, %v53
    %56 = vrot.lane.b32.xlu0 %v22, 32
    %v57 = vpop.permute.xlu0 %56
    %v59 = vadd.f32 %v55, %v57
    %v60 = vrot.slane %v22, 4
    %v62 = vrot.slane %v49, 4
    %v64 = vadd.f32 %v60, %v62
    %v65 = vrot.slane %v53, 4
    %v67 = vadd.f32 %v64, %v65
    %v68 = vrot.slane %v57, 4
    %v70 = vadd.f32 %v67, %v68
    %72 = vrot.lane.b32.xlu0 %v46, 32
    %v73 = vpop.permute.xlu0 %72
    %76 = vrot.lane.b32.xlu0 %v59, 64
    %v77 = vpop.permute.xlu0 %76
    %80 = vrot.lane.b32.xlu0 %v70, 96
    %v81 = vpop.permute.xlu0 %80
    %vm83 = vcmask 261120
    %v84 = vsel %vm83, %v35, %v73
    %vm85 = vcmask 523264
    %v86 = vsel %vm85, %v84, %v77
    %vm87 = vcmask 785408
    %v88 = vsel %vm87, %v86, %v81
    %89 = vst [vmem:[#allocation5] sm:$0xf] %v88
    // Predicated region
    $region10: #{tpu_custom_call.1} parent=1 // pred_check
      _
    $region11: #{tpu_custom_call.1} parent=1 // pred_check_branch
      %91 = sbr.rel (0) target = $region13
    $region12: #{tpu_custom_call.1} parent=1 // pred_region
      %s93 = ssub.s32 64, 64
      %94 = vsyncadd [#allocation4], %s93
      %s96 = sshll.u32 [#allocation5], 4
      %s97 = int_to_ptr.vmem [resolvable:$true] %s96
      %99 = dma.vmem_to_hbm [thread:$0]  %s97, 64, %s1, [#allocation4]
    $region13: #{tpu_custom_call.1} parent=1 // pred_fallthru
      _
    // Predicated region
    $region14: #{tpu_custom_call.1} parent=1 // pred_check
      _
    $region15: #{tpu_custom_call.1} parent=1 // pred_check_branch
      %101 = sbr.rel (0) target = $region17
    $region16: #{tpu_custom_call.1} parent=1 // pred_region
      %102 = dma.done [#allocation4], 64
    $region17: #{tpu_custom_call.1} parent=1 // pred_fallthru
      _
    %103 = vsyncpa [#allocation3], 1
    %104 = vsyncpa [#allocation4], 1

</llo_original>
